<compile_context>
chip_gen: v6e
topology: v6e:2x2x1
jax: 0.10.0
libtpu: 0.0.40
codegen_flags: <defaults>
</compile_context>

<pallas_src>
import functools

import jax
import jax.numpy as jnp
from jax.experimental import pallas as pl
from jax.experimental.pallas import tpu as pltpu


def _round_up(x, m):
    return ((x + m - 1) // m) * m


def _mlp_kernel(num_hidden, uid_ref, mid_ref, uembT_ref, membT_ref, *refs):
    """Fused gather + MLP, transposed layout (features on sublanes, batch on lanes).

    refs layout:
      refs[0 : 2*num_hidden]   = (W0^T, b0, W1^T, b1, ...)   hidden layers
                                 W^T: (H_out, H_in), b: (H_out, 1) float32
      refs[2*num_hidden + 0]   = W_last^T, (1, H_last) float32
      refs[2*num_hidden + 1]   = b_last, (1, 1) float32 in SMEM
      refs[-1]                 = output, (1, tile_b) float32
    """
    out_ref = refs[-1]
    param_refs = refs[:-1]
    tb = out_ref.shape[-1]

    # Fused embedding gather as a one-hot matmul (exact for 0/1 weights),
    # producing (E, tile_b) directly in the transposed layout.
    def gather_t(emb_t_ref, ids_ref):
        emb_t = emb_t_ref[...]                                  # (E, V)
        vocab = emb_t.shape[1]
        ids = ids_ref[...]                                      # (1, tb) int32
        onehot = (jax.lax.broadcasted_iota(jnp.int32, (vocab, tb), 0)
                  == ids).astype(emb_t.dtype)                   # (V, tb)
        return jnp.dot(emb_t, onehot, preferred_element_type=jnp.float32)

    u_t = gather_t(uembT_ref, uid_ref)                          # (E, tb)
    m_t = gather_t(membT_ref, mid_ref)                          # (E, tb)
    h = jnp.concatenate([u_t, m_t], axis=0)                     # (2E, tb) == x^T

    # Hidden layers: W^T @ h (MXU, f32 accumulation) + bias + ReLU (VPU).
    # Dropout == identity in eval mode.
    for layer in range(num_hidden):
        wt = param_refs[2 * layer][...]                         # (H_out, H_in)
        b = param_refs[2 * layer + 1][...]                      # (H_out, 1) f32
        z = jnp.dot(wt, h.astype(wt.dtype),
                    preferred_element_type=jnp.float32)         # (H_out, tb)
        h = jnp.maximum(z + b, 0.0)

    # Final projection: (1, H_last) @ (H_last, tb) -> (1, tb), lane-dense.
    w_last_t = param_refs[2 * num_hidden][...]                  # (1, H_last) f32
    b_last = param_refs[2 * num_hidden + 1][0, 0]               # SMEM scalar
    scores = jnp.dot(w_last_t, h, preferred_element_type=jnp.float32)
    out_ref[...] = (scores + b_last).astype(out_ref.dtype)


def mlp_recommender_forward(user_ids, movie_ids, params, *, tile_b=2048,
                            compute_dtype=None, single_buffer_weights=False):
    """Forward pass matching MLPRecommender.forward (eval mode).

    params: dict with
      'user_embed'  : (num_users, E)
      'movie_embed' : (num_movies, E)
      'weights'     : list of (in, out) matrices (hidden layers + final (H,1))
      'biases'      : list of (1, out) biases
    Returns: scores with torch-`.squeeze()` semantics ((B,) for B>1, () for B==1).
    """
    user_emb = params["user_embed"]
    movie_emb = params["movie_embed"]
    weights = params["weights"]
    biases = params["biases"]
    num_hidden = len(weights) - 1

    num_users, embed_dim = user_emb.shape
    num_movies = movie_emb.shape[0]
    in_dim = 2 * embed_dim
    hid = [w.shape[1] for w in weights[:-1]]
    B = user_ids.shape[0]

    # MXU operand dtype.  Use bf16 on v6e/v7x once hidden dims reach ~256
    # (halves HBM/VMEM traffic, matches the bf16 MXU); keep f32 on v5e (no
    # bf16 VPU) and at demo sizes so the 1e-5 check holds.  Accumulation,
    # biases and the final projection stay f32 regardless.
    if compute_dtype is None:
        compute_dtype = jnp.float32
    itemsize = jnp.dtype(compute_dtype).itemsize

    # ---- batch tile: big, lane-aligned, VMEM-bounded ---------------------
    b128 = _round_up(max(B, 1), 128)
    tb = _round_up(min(max(tile_b, 128), b128), 128)

    # Rough per-batch-column resident bytes: double-buffered id/output blocks,
    # one-hot temporaries and f32 activations.  Sized against a 24 MiB budget
    # so the same tile fits v5e/v6e (128 MiB) and v7x (64 MiB physical VMEM).
    per_col = (2 * 2 * 4 + 2 * 4
               + (num_users + num_movies) * itemsize
               + 4 * (in_dim + sum(hid) + 1))
    budget = 24 * 1024 * 1024
    max_tb = max(128, (budget // max(per_col, 1)) // 128 * 128)
    tb = min(tb, max_tb)

    # Keep >= 2 grid steps when the batch allows, so the 'parallel' axis can be
    # sharded across both TensorCores on v7x (harmless on v5e/v6e).
    if b128 >= 2 * 128:
        tb = min(tb, max(128, (b128 // 2) // 128 * 128))

    B_pad = _round_up(B, tb)
    grid = (B_pad // tb,)

    # ---- inputs: lane-dense id rows (padding rows index 0, sliced off) ---
    uid = user_ids.astype(jnp.int32).reshape(1, B)
    mid = movie_ids.astype(jnp.int32).reshape(1, B)
    if B_pad != B:
        pad = ((0, 0), (0, B_pad - B))
        uid = jnp.pad(uid, pad)
        mid = jnp.pad(mid, pad)

    # ---- parameters, pre-transposed for the batch-on-lanes layout --------
    uembT = user_emb.T.astype(compute_dtype)                    # (E, U)
    membT = movie_emb.T.astype(compute_dtype)                   # (E, M)
    w_hidden_t = [w.T.astype(compute_dtype) for w in weights[:-1]]       # (H_out, H_in)
    b_hidden = [b.reshape(-1, 1).astype(jnp.float32) for b in biases[:-1]]  # (H, 1)
    w_last_t = weights[-1].T.astype(jnp.float32)                # (1, H_last)
    b_last = biases[-1].reshape(1, 1).astype(jnp.float32)       # (1, 1)

    def resident(shape):
        # Grid-invariant block (constant index_map), whole array in VMEM.
        # Buffered(1) drops the useless second pipeline buffer -- matters for
        # production-width weights on v7x's 64 MiB VMEM; off by default here.
        if single_buffer_weights:
            return pl.BlockSpec(shape, lambda i: (0, 0),
                                pipeline_mode=pl.Buffered(1))
        return pl.BlockSpec(shape, lambda i: (0, 0))

    ids_spec = pl.BlockSpec((1, tb), lambda i: (0, i))
    in_specs = [ids_spec, ids_spec, resident(uembT.shape), resident(membT.shape)]
    flat_params = []
    for wt, b in zip(w_hidden_t, b_hidden):
        in_specs += [resident(wt.shape), resident(b.shape)]
        flat_params += [wt, b]
    in_specs.append(resident(w_last_t.shape))
    in_specs.append(pl.BlockSpec(memory_space=pltpu.MemorySpace.SMEM))  # b_last scalar
    flat_params += [w_last_t, b_last]

    out_specs = pl.BlockSpec((1, tb), lambda i: (0, i))

    # Advisory cost estimate (includes the one-hot gather matmuls).
    dims = [in_dim] + hid + [1]
    flops = 2 * B_pad * ((num_users + num_movies) * embed_dim
                         + sum(a * b for a, b in zip(dims[:-1], dims[1:])))
    bytes_accessed = int(
        B_pad * (2 * 4 + 4)
        + uembT.size * uembT.dtype.itemsize + membT.size * membT.dtype.itemsize
        + sum(a.size * a.dtype.itemsize for a in flat_params)
    )

    kernel = functools.partial(_mlp_kernel, num_hidden)

    out = pl.pallas_call(
        kernel,
        out_shape=jax.ShapeDtypeStruct((1, B_pad), jnp.float32),
        grid_spec=pltpu.PrefetchScalarGridSpec(
            num_scalar_prefetch=0,
            grid=grid,
            in_specs=in_specs,
            out_specs=out_specs,
        ),
        compiler_params=pltpu.CompilerParams(
            dimension_semantics=("parallel",),
            vmem_limit_bytes=32 * 1024 * 1024,
        ),
        cost_estimate=pl.CostEstimate(
            flops=flops, transcendentals=0, bytes_accessed=bytes_accessed),
    )(uid, mid, uembT, membT, *flat_params)

    scores = out[0, :B]
    return scores.squeeze()   # torch .squeeze(): (B,) for B>1, () for B==1


def init_params(key, num_users, num_movies, embed_dim, hidden_dims):
    """Deterministic synthetic parameter init (shapes follow __init__)."""
    keys = jax.random.split(key, 2 + 2 * (len(hidden_dims) + 1))
    params = {
        "user_embed": jax.random.normal(keys[0], (num_users, embed_dim),
                                        jnp.float32) * 0.1,
        "movie_embed": jax.random.normal(keys[1], (num_movies, embed_dim),
                                         jnp.float32) * 0.1,
        "weights": [],
        "biases": [],
    }
    dims = [embed_dim * 2] + list(hidden_dims) + [1]
    kidx = 2
    for d_in, d_out in zip(dims[:-1], dims[1:]):
        w = jax.random.normal(keys[kidx], (d_in, d_out), jnp.float32) * 0.05
        b = jax.random.normal(keys[kidx + 1], (1, d_out), jnp.float32) * 0.01
        params["weights"].append(w)
        params["biases"].append(b)
        kidx += 2
    return params


if __name__ == "__main__":
    key = jax.random.PRNGKey(0)

    # Small deterministic config consistent with the module.
    num_users = 10
    num_movies = 12
    embed_dim = 16
    hidden_dims = [32, 16]   # synthetic stand-in for Optuna best_params
    batch = 8

    k_params, k_u, k_m = jax.random.split(key, 3)
    params = init_params(k_params, num_users, num_movies, embed_dim, hidden_dims)

    user_ids = jax.random.randint(k_u, (batch,), 0, num_users, dtype=jnp.int32)
    movie_ids = jax.random.randint(k_m, (batch,), 0, num_movies, dtype=jnp.int32)

    out = mlp_recommender_forward(user_ids, movie_ids, params)
    out = jax.block_until_ready(out)

    # Reference check in plain JAX (same eval-mode semantics).
    u = params["user_embed"][user_ids]
    m = params["movie_embed"][movie_ids]
    h = jnp.concatenate([u, m], axis=1)
    for w, b in zip(params["weights"][:-1], params["biases"][:-1]):
        h = jnp.maximum(h @ w + b, 0.0)
    ref = (h @ params["weights"][-1] + params["biases"][-1]).squeeze(-1)

    assert out.shape == (batch,)
    assert jnp.allclose(out, ref, atol=1e-5, rtol=1e-5)

    print("KERNEL_OK")
</pallas_src>

<mosaic_0001>
module attributes {stable_mosaic.version = 11 : i64} {
  func.func @_mlp_kernel(%arg0: i32, %arg1: memref<1x128xi32, #tpu.memory_space<vmem>>, %arg2: memref<1x128xi32, #tpu.memory_space<vmem>>, %arg3: memref<16x10xf32, #tpu.memory_space<vmem>>, %arg4: memref<16x12xf32, #tpu.memory_space<vmem>>, %arg5: memref<32x32xf32, #tpu.memory_space<vmem>>, %arg6: memref<32x1xf32, #tpu.memory_space<vmem>>, %arg7: memref<16x32xf32, #tpu.memory_space<vmem>>, %arg8: memref<16x1xf32, #tpu.memory_space<vmem>>, %arg9: memref<1x16xf32, #tpu.memory_space<vmem>>, %arg10: memref<1x1xf32, #tpu.memory_space<smem>>, %arg11: memref<1x128xf32, #tpu.memory_space<vmem>>) attributes {dimension_semantics = [#tpu.dimension_semantics<parallel>], iteration_bounds = array<i64: 1>, scalar_prefetch = 0 : i64, scratch_operands = 0 : i64, tpu.core_type = #tpu.core_type<tc>, window_params = [{transform_indices = @transform_0, window_bounds = array<i64: 1, 128>}, {transform_indices = @transform_1, window_bounds = array<i64: 1, 128>}, {pipeline_mode = #tpu.pipeline_mode<synchronous>, transform_indices = @transform_2, window_bounds = array<i64: 16, 10>}, {pipeline_mode = #tpu.pipeline_mode<synchronous>, transform_indices = @transform_3, window_bounds = array<i64: 16, 12>}, {pipeline_mode = #tpu.pipeline_mode<synchronous>, transform_indices = @transform_4, window_bounds = array<i64: 32, 32>}, {pipeline_mode = #tpu.pipeline_mode<synchronous>, transform_indices = @transform_5, window_bounds = array<i64: 32, 1>}, {pipeline_mode = #tpu.pipeline_mode<synchronous>, transform_indices = @transform_6, window_bounds = array<i64: 16, 32>}, {pipeline_mode = #tpu.pipeline_mode<synchronous>, transform_indices = @transform_7, window_bounds = array<i64: 16, 1>}, {pipeline_mode = #tpu.pipeline_mode<synchronous>, transform_indices = @transform_8, window_bounds = array<i64: 1, 16>}, {transform_indices = @transform_9, window_bounds = array<i64: 1, 1>}, {transform_indices = @transform_10, window_bounds = array<i64: 1, 128>}]} {
    %c0 = arith.constant 0 : index
    %c0_0 = arith.constant 0 : index
    %0 = vector.load %arg3[%c0, %c0_0] : memref<16x10xf32, #tpu.memory_space<vmem>>, vector<16x10xf32>
    %c0_1 = arith.constant 0 : index
    %c0_2 = arith.constant 0 : index
    %1 = vector.load %arg1[%c0_1, %c0_2] : memref<1x128xi32, #tpu.memory_space<vmem>>, vector<1x128xi32>
    %2 = tpu.iota {dimensions = array<i32: 0>} : vector<10x128xi32>
    %3 = vector.broadcast %1 : vector<1x128xi32> to vector<10x128xi32>
    %4 = arith.cmpi eq, %2, %3 : vector<10x128xi32>
    %5 = arith.extui %4 : vector<10x128xi1> to vector<10x128xi32>
    %6 = arith.sitofp %5 : vector<10x128xi32> to vector<10x128xf32>
    %cst = arith.constant dense<0.000000e+00> : vector<16x128xf32>
    %7 = tpu.matmul %0, %6, %cst {dimension_numbers = #tpu.dot_dimension_numbers<[1], [0], [0], [1], [0, 0, 1, 1], [], []>} : vector<16x10xf32>, vector<10x128xf32>, vector<16x128xf32> -> vector<16x128xf32>
    %c0_3 = arith.constant 0 : index
    %c0_4 = arith.constant 0 : index
    %8 = vector.load %arg4[%c0_3, %c0_4] : memref<16x12xf32, #tpu.memory_space<vmem>>, vector<16x12xf32>
    %c0_5 = arith.constant 0 : index
    %c0_6 = arith.constant 0 : index
    %9 = vector.load %arg2[%c0_5, %c0_6] : memref<1x128xi32, #tpu.memory_space<vmem>>, vector<1x128xi32>
    %10 = tpu.iota {dimensions = array<i32: 0>} : vector<12x128xi32>
    %11 = vector.broadcast %9 : vector<1x128xi32> to vector<12x128xi32>
    %12 = arith.cmpi eq, %10, %11 : vector<12x128xi32>
    %13 = arith.extui %12 : vector<12x128xi1> to vector<12x128xi32>
    %14 = arith.sitofp %13 : vector<12x128xi32> to vector<12x128xf32>
    %cst_7 = arith.constant dense<0.000000e+00> : vector<16x128xf32>
    %15 = tpu.matmul %8, %14, %cst_7 {dimension_numbers = #tpu.dot_dimension_numbers<[1], [0], [0], [1], [0, 0, 1, 1], [], []>} : vector<16x12xf32>, vector<12x128xf32>, vector<16x128xf32> -> vector<16x128xf32>
    %16 = tpu.concatenate %7, %15 in 0 : vector<16x128xf32>, vector<16x128xf32> -> vector<32x128xf32>
    %c0_8 = arith.constant 0 : index
    %c0_9 = arith.constant 0 : index
    %17 = vector.load %arg5[%c0_8, %c0_9] : memref<32x32xf32, #tpu.memory_space<vmem>>, vector<32x32xf32>
    %c0_10 = arith.constant 0 : index
    %c0_11 = arith.constant 0 : index
    %18 = vector.load %arg6[%c0_10, %c0_11] : memref<32x1xf32, #tpu.memory_space<vmem>>, vector<32x1xf32>
    %cst_12 = arith.constant dense<0.000000e+00> : vector<32x128xf32>
    %19 = tpu.matmul %17, %16, %cst_12 {dimension_numbers = #tpu.dot_dimension_numbers<[1], [0], [0], [1], [0, 0, 1, 1], [], []>} : vector<32x32xf32>, vector<32x128xf32>, vector<32x128xf32> -> vector<32x128xf32>
    %20 = vector.broadcast %18 : vector<32x1xf32> to vector<32x128xf32>
    %21 = arith.addf %19, %20 : vector<32x128xf32>
    %cst_13 = arith.constant 0.000000e+00 : f32
    %22 = vector.broadcast %cst_13 : f32 to vector<32x128xf32>
    %23 = arith.maximumf %21, %22 : vector<32x128xf32>
    %c0_14 = arith.constant 0 : index
    %c0_15 = arith.constant 0 : index
    %24 = vector.load %arg7[%c0_14, %c0_15] : memref<16x32xf32, #tpu.memory_space<vmem>>, vector<16x32xf32>
    %c0_16 = arith.constant 0 : index
    %c0_17 = arith.constant 0 : index
    %25 = vector.load %arg8[%c0_16, %c0_17] : memref<16x1xf32, #tpu.memory_space<vmem>>, vector<16x1xf32>
    %cst_18 = arith.constant dense<0.000000e+00> : vector<16x128xf32>
    %26 = tpu.matmul %24, %23, %cst_18 {dimension_numbers = #tpu.dot_dimension_numbers<[1], [0], [0], [1], [0, 0, 1, 1], [], []>} : vector<16x32xf32>, vector<32x128xf32>, vector<16x128xf32> -> vector<16x128xf32>
    %27 = vector.broadcast %25 : vector<16x1xf32> to vector<16x128xf32>
    %28 = arith.addf %26, %27 : vector<16x128xf32>
    %cst_19 = arith.constant 0.000000e+00 : f32
    %29 = vector.broadcast %cst_19 : f32 to vector<16x128xf32>
    %30 = arith.maximumf %28, %29 : vector<16x128xf32>
    %c0_20 = arith.constant 0 : index
    %c0_21 = arith.constant 0 : index
    %31 = vector.load %arg9[%c0_20, %c0_21] : memref<1x16xf32, #tpu.memory_space<vmem>>, vector<1x16xf32>
    %c0_22 = arith.constant 0 : index
    %c0_23 = arith.constant 0 : index
    %32 = memref.load %arg10[%c0_22, %c0_23] : memref<1x1xf32, #tpu.memory_space<smem>>
    %cst_24 = arith.constant dense<0.000000e+00> : vector<1x128xf32>
    %33 = tpu.matmul %31, %30, %cst_24 {dimension_numbers = #tpu.dot_dimension_numbers<[1], [0], [0], [1], [0, 0, 1, 1], [], []>} : vector<1x16xf32>, vector<16x128xf32>, vector<1x128xf32> -> vector<1x128xf32>
    %34 = vector.broadcast %32 : f32 to vector<1x128xf32>
    %35 = arith.addf %33, %34 : vector<1x128xf32>
    %c0_25 = arith.constant 0 : index
    %c0_26 = arith.constant 0 : index
    %36 = vector.load %arg11[%c0_25, %c0_26] : memref<1x128xf32, #tpu.memory_space<vmem>>, vector<1x128xf32>
    tpu.vector_store %arg11[%c0_25, %c0_26], %35 {strides = array<i32>} : memref<1x128xf32, #tpu.memory_space<vmem>>, vector<1x128xf32>,
    return
  }
  func.func @transform_0(%arg0: i32) -> (i32, i32) {
    %c0_i32 = arith.constant 0 : i32
    %c0_i32_0 = arith.constant 0 : i32
    return %c0_i32, %arg0 : i32, i32
  }
  func.func @transform_1(%arg0: i32) -> (i32, i32) {
    %c0_i32 = arith.constant 0 : i32
    %c0_i32_0 = arith.constant 0 : i32
    return %c0_i32, %arg0 : i32, i32
  }
  func.func @transform_2(%arg0: i32) -> (i32, i32) {
    %c0_i32 = arith.constant 0 : i32
    %c0_i32_0 = arith.constant 0 : i32
    %c0_i32_1 = arith.constant 0 : i32
    return %c0_i32, %c0_i32_0 : i32, i32
  }
  func.func @transform_3(%arg0: i32) -> (i32, i32) {
    %c0_i32 = arith.constant 0 : i32
    %c0_i32_0 = arith.constant 0 : i32
    %c0_i32_1 = arith.constant 0 : i32
    return %c0_i32, %c0_i32_0 : i32, i32
  }
  func.func @transform_4(%arg0: i32) -> (i32, i32) {
    %c0_i32 = arith.constant 0 : i32
    %c0_i32_0 = arith.constant 0 : i32
    %c0_i32_1 = arith.constant 0 : i32
    return %c0_i32, %c0_i32_0 : i32, i32
  }
  func.func @transform_5(%arg0: i32) -> (i32, i32) {
    %c0_i32 = arith.constant 0 : i32
    %c0_i32_0 = arith.constant 0 : i32
    %c0_i32_1 = arith.constant 0 : i32
    return %c0_i32, %c0_i32_0 : i32, i32
  }
  func.func @transform_6(%arg0: i32) -> (i32, i32) {
    %c0_i32 = arith.constant 0 : i32
    %c0_i32_0 = arith.constant 0 : i32
    %c0_i32_1 = arith.constant 0 : i32
    return %c0_i32, %c0_i32_0 : i32, i32
  }
  func.func @transform_7(%arg0: i32) -> (i32, i32) {
    %c0_i32 = arith.constant 0 : i32
    %c0_i32_0 = arith.constant 0 : i32
    %c0_i32_1 = arith.constant 0 : i32
    return %c0_i32, %c0_i32_0 : i32, i32
  }
  func.func @transform_8(%arg0: i32) -> (i32, i32) {
    %c0_i32 = arith.constant 0 : i32
    %c0_i32_0 = arith.constant 0 : i32
    %c0_i32_1 = arith.constant 0 : i32
    return %c0_i32, %c0_i32_0 : i32, i32
  }
  func.func @transform_9(%arg0: i32) -> (i32, i32) {
    %c0_i32 = arith.constant 0 : i32
    %c0_i32_0 = arith.constant 0 : i32
    %c0_i32_1 = arith.constant 0 : i32
    return %c0_i32, %c0_i32_0 : i32, i32
  }
  func.func @transform_10(%arg0: i32) -> (i32, i32) {
    %c0_i32 = arith.constant 0 : i32
    %c0_i32_0 = arith.constant 0 : i32
    return %c0_i32, %arg0 : i32, i32
  }
}

</mosaic_0001>

<llo_original>
// kernel: tpu_custom_call.1
$region0: #{tpu_custom_call.1}
  #allocation0 [shape = 'u32[]', space=smem, size = 0x4, offset = 0x4, fixed_abs, tag = 'smem constant byte address 0x4 - core index']
  #allocation1 [shape = 'u32[144,128]{1,0:T(1,128)}', space=vmem, size = 0x12000, scoped, tag = 'internal scratch']
  #allocation2 [shape = 'f32[1,1]{1,0:T(1,128)S(6)}', space=smem, size = 0x200, scoped, tag = 'scoped memory for tpu_custom_call.1']
  %s0 = inlined_call_operand.vmem [shape: s32[1,128], index: 0, kind: input, shape index: {}]
  %s1 = inlined_call_operand.vmem [shape: s32[1,128], index: 1, kind: input, shape index: {}]
  %s2 = inlined_call_operand.vmem [shape: f32[16,10], index: 2, kind: input, shape index: {}]
  %s3 = inlined_call_operand.hbm [shape: f32[16,12], index: 3, kind: input, shape index: {}]
  %s4 = inlined_call_operand.vmem [shape: f32[32,32], index: 4, kind: input, shape index: {}]
  %s5 = inlined_call_operand.vmem [shape: f32[32,1], index: 5, kind: input, shape index: {}]
  %s6 = inlined_call_operand.hbm [shape: f32[16,32], index: 6, kind: input, shape index: {}]
  %s7 = inlined_call_operand.vmem [shape: f32[16,1], index: 7, kind: input, shape index: {}]
  %s8 = inlined_call_operand.vmem [shape: f32[1,16], index: 8, kind: input, shape index: {}]
  %s9 = inlined_call_operand.<no memory space> [shape: f32[1,1], index: 9, kind: input, shape index: {}]
  %s10 = inlined_call_operand.hbm [shape: f32[1,128], index: 10, kind: output, shape index: {}]
  %s11 = sld [smem:[#allocation0]]
  $region58: #{tpu_custom_call.1} parent=0
    _
  %s13 = ssub.s32 1, %s11
  %s14 = scalar_select 0, %s13, %s11
  %15 = sst [smem:[#allocation2]] %s9
  $region1: #{tpu_custom_call.1} parent=0
    #allocation3 [shape = 'u8[8192]{0}', space=vmem, size = 0x2000, scoped, tag = 'input window, operand 3, single buffered']
    #allocation4 [shape = 's32[1]{0}', space=sflag, size = 0x4, scoped, tag = 'scoped memory for tpu_custom_call.1']
    #allocation5 [shape = 's32[1]{0}', space=sflag, size = 0x4, scoped, tag = 'scoped memory for tpu_custom_call.1']
    #allocation6 [shape = 'u8[8192]{0}', space=vmem, size = 0x2000, scoped, tag = 'input window, operand 6, single buffered']
    #allocation7 [shape = 's32[1]{0}', space=sflag, size = 0x4, scoped, tag = 'scoped memory for tpu_custom_call.1']
    #allocation8 [shape = 'u8[512]{0}', space=vmem, size = 0x400, scoped, tag = 'output window, operand 0, single buffered']
    %16 = vsyncpa [#allocation4], 0
    %17 = vsyncpa [#allocation7], 0
    %18 = vsyncpa [#allocation5], 0
    // Predicated region
    $region2: #{tpu_custom_call.1} parent=1 // pred_check
      _
    $region3: #{tpu_custom_call.1} parent=1 // pred_check_branch
      %20 = sbr.rel (0) target = $region5
    $region4: #{tpu_custom_call.1} parent=1 // pred_region
      _
    $region5: #{tpu_custom_call.1} parent=1 // pred_fallthru
      _
    // Predicated region
    $region6: #{tpu_custom_call.1} parent=1 // pred_check
      _
    $region7: #{tpu_custom_call.1} parent=1 // pred_check_branch
      %22 = sbr.rel (0) target = $region9
    $region8: #{tpu_custom_call.1} parent=1 // pred_region
      _
    $region9: #{tpu_custom_call.1} parent=1 // pred_fallthru
      _
    // Predicated region
    $region10: #{tpu_custom_call.1} parent=1 // pred_check
      _
    $region11: #{tpu_custom_call.1} parent=1 // pred_check_branch
      %24 = sbr.rel (0) target = $region13
    $region12: #{tpu_custom_call.1} parent=1 // pred_region
      _
    $region13: #{tpu_custom_call.1} parent=1 // pred_fallthru
      _
    // Predicated region
    $region14: #{tpu_custom_call.1} parent=1 // pred_check
      _
    $region15: #{tpu_custom_call.1} parent=1 // pred_check_branch
      %26 = sbr.rel (0) target = $region17
    $region16: #{tpu_custom_call.1} parent=1 // pred_region
      %s28 = ssub.s32 256, 256
      %29 = vsyncadd [#allocation4], %s28
      %s30 = sshll.u32 [#allocation3], 4
      %s31 = int_to_ptr.vmem [resolvable:$true] %s30
      %36 = dma.hbm_to_vmem [thread:$0]  %s3, 256, %s31, [#allocation4], 128, 128, 8
    $region17: #{tpu_custom_call.1} parent=1 // pred_fallthru
      _
    // Predicated region
    $region18: #{tpu_custom_call.1} parent=1 // pred_check
      _
    $region19: #{tpu_custom_call.1} parent=1 // pred_check_branch
      %38 = sbr.rel (0) target = $region21
    $region20: #{tpu_custom_call.1} parent=1 // pred_region
      _
    $region21: #{tpu_custom_call.1} parent=1 // pred_fallthru
      _
    // Predicated region
    $region22: #{tpu_custom_call.1} parent=1 // pred_check
      _
    $region23: #{tpu_custom_call.1} parent=1 // pred_check_branch
      %40 = sbr.rel (0) target = $region25
    $region24: #{tpu_custom_call.1} parent=1 // pred_region
      _
    $region25: #{tpu_custom_call.1} parent=1 // pred_fallthru
      _
    // Predicated region
    $region26: #{tpu_custom_call.1} parent=1 // pred_check
      _
    $region27: #{tpu_custom_call.1} parent=1 // pred_check_branch
      %42 = sbr.rel (0) target = $region29
    $region28: #{tpu_custom_call.1} parent=1 // pred_region
      %s44 = ssub.s32 256, 256
      %45 = vsyncadd [#allocation7], %s44
      %s46 = sshll.u32 [#allocation6], 4
      %s47 = int_to_ptr.vmem [resolvable:$true] %s46
      %52 = dma.hbm_to_vmem [thread:$0]  %s6, 256, %s47, [#allocation7], 128, 128, 8
    $region29: #{tpu_custom_call.1} parent=1 // pred_fallthru
      _
    // Predicated region
    $region30: #{tpu_custom_call.1} parent=1 // pred_check
      _
    $region31: #{tpu_custom_call.1} parent=1 // pred_check_branch
      %54 = sbr.rel (0) target = $region33
    $region32: #{tpu_custom_call.1} parent=1 // pred_region
      _
    $region33: #{tpu_custom_call.1} parent=1 // pred_fallthru
      _
    // Predicated region
    $region34: #{tpu_custom_call.1} parent=1 // pred_check
      _
    $region35: #{tpu_custom_call.1} parent=1 // pred_check_branch
      %56 = sbr.rel (0) target = $region37
    $region36: #{tpu_custom_call.1} parent=1 // pred_region
      _
    $region37: #{tpu_custom_call.1} parent=1 // pred_fallthru
      _
    // Predicated region
    $region38: #{tpu_custom_call.1} parent=1 // pred_check
      _
    $region39: #{tpu_custom_call.1} parent=1 // pred_check_branch
      %58 = sbr.rel (0) target = $region41
    $region40: #{tpu_custom_call.1} parent=1 // pred_region
      _
    $region41: #{tpu_custom_call.1} parent=1 // pred_fallthru
      _
    // Predicated region
    $region42: #{tpu_custom_call.1} parent=1 // pred_check
      _
    $region43: #{tpu_custom_call.1} parent=1 // pred_check_branch
      %60 = sbr.rel (0) target = $region45
    $region44: #{tpu_custom_call.1} parent=1 // pred_region
      %61 = dma.done [#allocation4], 256
    $region45: #{tpu_custom_call.1} parent=1 // pred_fallthru
      _
    // Predicated region
    $region46: #{tpu_custom_call.1} parent=1 // pred_check
      _
    $region47: #{tpu_custom_call.1} parent=1 // pred_check_branch
      %63 = sbr.rel (0) target = $region49
    $region48: #{tpu_custom_call.1} parent=1 // pred_region
      %64 = dma.done [#allocation7], 256
    $region49: #{tpu_custom_call.1} parent=1 // pred_fallthru
      _
    %v65 = vld [vmem:[%s2] sm:$0xff]
    %v66 = vld [vmem:[%s2 + $0x8] sm:$0xff]
    %v67 = vld [vmem:[%s0] sm:$0x1]
    %v68 = vlaneseq
    %v69 = vshrl.u32 %v68, 7
    %v70 = vadd.s32 %v69, 8
    %v71 = vlaneseq
    %v72 = vshrl.u32 %v71, 7
    %v73 = vsub.s32 0, %v72
    %v74 = vrot.slane %v67, %v73
    %vm75 = vcmp.eq.s32.totalorder %v69, %v74
    %vm76 = vcmp.eq.s32.totalorder %v70, %v74
    %v77 = vsel %vm75, 1, 0
    %v78 = vsel %vm76, 1, 0
    %v79 = vcvt.s32.f32 %v77
    %v80 = vcvt.s32.f32 %v78
    %vm81 = vcmask 80896
    %v83 = vsel %vm81, %v65, 0
    %v86 = vsel %vm81, %v66, 0
    %vm88 = vcmask 1041408
    %v90 = vsel %vm88, %v80, 0
    %92 = vmatprep.subr.mxu0 0.0
    %93 = vmatpush1.msra.mxu0 0.0
    %94 = vmatprep.subr.mxu0 0.0
    %95 = vmatpush1.msra.mxu0 0.0
    %96 = vmatprep.subr.mxu0 0.0
    %97 = vmatpush1.msra.mxu0 0.0
    %98 = vmatprep.subr.mxu0 0.0
    %99 = vmatpush1.msra.mxu0 0.0
    %100 = vmatprep.subr.mxu0 0.0
    %101 = vmatpush1.msra.mxu0 0.0
    %102 = vmatprep.subr.mxu0 0.0
    %103 = vmatpush1.msra.mxu0 0.0
    %104 = vmatprep.subr.mxu0 0.0
    %105 = vmatpush1.msra.mxu0 0.0
    %106 = vmatprep.subr.mxu0 0.0
    %107 = vmatpush1.msra.mxu0 0.0
    %108 = vmatprep.subr.mxu0 0.0
    %109 = vmatpush1.msra.mxu0 0.0
    %110 = vmatprep.subr.mxu0 0.0
    %111 = vmatpush1.msra.mxu0 0.0
    %112 = vmatprep.subr.mxu0 0.0
    %113 = vmatpush1.msra.mxu0 0.0
    %114 = vmatprep.subr.mxu0 0.0
    %115 = vmatpush1.msra.mxu0 0.0
    %116 = vmatprep.subr.mxu0 0.0
    %117 = vmatpush1.msra.mxu0 0.0
    %118 = vmatprep.subr.mxu0 0.0
    %119 = vmatpush1.msra.mxu0 0.0
    %120 = vmatprep.subr.mxu0 0.0
    %121 = vmatpush1.msra.mxu0 %v90
    %122 = vmatprep.subr.mxu0 0.0
    %123 = vmatpush1.msra.mxu0 %v79
    %124 = vmatprep.subr.mxu0 0.0
    %125 = vmatpush2.msra.mxu0 0.0
    %126 = vmatprep.subr.mxu0 0.0
    %127 = vmatpush2.msra.mxu0 0.0
    %128 = vmatprep.subr.mxu0 0.0
    %129 = vmatpush2.msra.mxu0 0.0
    %130 = vmatprep.subr.mxu0 0.0
    %131 = vmatpush2.msra.mxu0 0.0
    %132 = vmatprep.subr.mxu0 0.0
    %133 = vmatpush2.msra.mxu0 0.0
    %134 = vmatprep.subr.mxu0 0.0
    %135 = vmatpush2.msra.mxu0 0.0
    %136 = vmatprep.subr.mxu0 0.0
    %137 = vmatpush2.msra.mxu0 0.0
    %138 = vmatprep.subr.mxu0 0.0
    %139 = vmatpush2.msra.mxu0 0.0
    %140 = vmatprep.subr.mxu0 0.0
    %141 = vmatpush2.msra.mxu0 0.0
    %142 = vmatprep.subr.mxu0 0.0
    %143 = vmatpush2.msra.mxu0 0.0
    %144 = vmatprep.subr.mxu0 0.0
    %145 = vmatpush2.msra.mxu0 0.0
    %146 = vmatprep.subr.mxu0 0.0
    %147 = vmatpush2.msra.mxu0 0.0
    %148 = vmatprep.subr.mxu0 0.0
    %149 = vmatpush2.msra.mxu0 0.0
    %150 = vmatprep.subr.mxu0 0.0
    %151 = vmatpush2.msra.mxu0 0.0
    %152 = vmatprep.subr.mxu0 0.0
    %153 = vmatpush2.msra.mxu0 0.0
    %154 = vmatprep.subr.mxu0 0.0
    %155 = vmatpush2.msra.mxu0 0.0
    %156 = vmatprep.mubr.f32.mxu0 0.0
    %157 = vmatmul.mubr.f32.gmra.mxu0 %v83
    %v158 = vpop.f32.mrf.mxu0
    %v159 = vadd.f32 0.0, %v158
    %v160 = vpop.f32.mrf.mxu0
    %161 = vmatprep.mubr.f32.mxu0 0.0
    %162 = vmatmul.mubr.f32.gmra.mxu0 %v86
    %v163 = vpop.f32.mrf.mxu0
    %v164 = vadd.f32 0.0, %v163
    %v165 = vpop.f32.mrf.mxu0
    %166 = vdwg.mxu0
    %v167 = vld [vmem:[#allocation3] sm:$0xff]
    %v168 = vld [vmem:[#allocation3 + $0x8] sm:$0xff]
    %v169 = vld [vmem:[%s1] sm:$0x1]
    %v170 = vlaneseq
    %v171 = vshrl.u32 %v170, 7
    %v172 = vsub.s32 0, %v171
    %v173 = vrot.slane %v169, %v172
    %vm174 = vcmp.eq.s32.totalorder %v69, %v173
    %vm175 = vcmp.eq.s32.totalorder %v70, %v173
    %v176 = vsel %vm174, 1, 0
    %v177 = vsel %vm175, 1, 0
    %v178 = vcvt.s32.f32 %v176
    %v179 = vcvt.s32.f32 %v177
    %vm180 = vcmask 97280
    %v182 = vsel %vm180, %v167, 0
    %v185 = vsel %vm180, %v168, 0
    %vm187 = vcmask 1043456
    %v189 = vsel %vm187, %v179, 0
    %191 = vmatprep.subr.mxu0 0.0
    %192 = vmatpush1.msra.mxu0 0.0
    %193 = vmatprep.subr.mxu0 0.0
    %194 = vmatpush1.msra.mxu0 0.0
    %195 = vmatprep.subr.mxu0 0.0
    %196 = vmatpush1.msra.mxu0 0.0
    %197 = vmatprep.subr.mxu0 0.0
    %198 = vmatpush1.msra.mxu0 0.0
    %199 = vmatprep.subr.mxu0 0.0
    %200 = vmatpush1.msra.mxu0 0.0
    %201 = vmatprep.subr.mxu0 0.0
    %202 = vmatpush1.msra.mxu0 0.0
    %203 = vmatprep.subr.mxu0 0.0
    %204 = vmatpush1.msra.mxu0 0.0
    %205 = vmatprep.subr.mxu0 0.0
    %206 = vmatpush1.msra.mxu0 0.0
    %207 = vmatprep.subr.mxu0 0.0
    %208 = vmatpush1.msra.mxu0 0.0
    %209 = vmatprep.subr.mxu0 0.0
    %210 = vmatpush1.msra.mxu0 0.0
    %211 = vmatprep.subr.mxu0 0.0
    %212 = vmatpush1.msra.mxu0 0.0
    %213 = vmatprep.subr.mxu0 0.0
    %214 = vmatpush1.msra.mxu0 0.0
    %215 = vmatprep.subr.mxu0 0.0
    %216 = vmatpush1.msra.mxu0 0.0
    %217 = vmatprep.subr.mxu0 0.0
    %218 = vmatpush1.msra.mxu0 0.0
    %219 = vmatprep.subr.mxu0 0.0
    %220 = vmatpush1.msra.mxu0 %v189
    %221 = vmatprep.subr.mxu0 0.0
    %222 = vmatpush1.msra.mxu0 %v178
    %223 = vmatprep.subr.mxu0 0.0
    %224 = vmatpush2.msra.mxu0 0.0
    %225 = vmatprep.subr.mxu0 0.0
    %226 = vmatpush2.msra.mxu0 0.0
    %227 = vmatprep.subr.mxu0 0.0
    %228 = vmatpush2.msra.mxu0 0.0
    %229 = vmatprep.subr.mxu0 0.0
    %230 = vmatpush2.msra.mxu0 0.0
    %231 = vmatprep.subr.mxu0 0.0
    %232 = vmatpush2.msra.mxu0 0.0
    %233 = vmatprep.subr.mxu0 0.0
    %234 = vmatpush2.msra.mxu0 0.0
    %235 = vmatprep.subr.mxu0 0.0
    %236 = vmatpush2.msra.mxu0 0.0
    %237 = vmatprep.subr.mxu0 0.0
    %238 = vmatpush2.msra.mxu0 0.0
    %239 = vmatprep.subr.mxu0 0.0
    %240 = vmatpush2.msra.mxu0 0.0
    %241 = vmatprep.subr.mxu0 0.0
    %242 = vmatpush2.msra.mxu0 0.0
    %243 = vmatprep.subr.mxu0 0.0
    %244 = vmatpush2.msra.mxu0 0.0
    %245 = vmatprep.subr.mxu0 0.0
    %246 = vmatpush2.msra.mxu0 0.0
    %247 = vmatprep.subr.mxu0 0.0
    %248 = vmatpush2.msra.mxu0 0.0
    %249 = vmatprep.subr.mxu0 0.0
    %250 = vmatpush2.msra.mxu0 0.0
    %251 = vmatprep.subr.mxu0 0.0
    %252 = vmatpush2.msra.mxu0 0.0
    %253 = vmatprep.subr.mxu0 0.0
    %254 = vmatpush2.msra.mxu0 0.0
    %255 = vmatprep.mubr.f32.mxu0 0.0
    %256 = vmatmul.mubr.f32.gmra.mxu0 %v182
    %v257 = vpop.f32.mrf.mxu0
    %v258 = vadd.f32 0.0, %v257
    %v259 = vpop.f32.mrf.mxu0
    %260 = vmatprep.mubr.f32.mxu0 0.0
    %261 = vmatmul.mubr.f32.gmra.mxu0 %v185
    %v262 = vpop.f32.mrf.mxu0
    %v263 = vadd.f32 0.0, %v262
    %v264 = vpop.f32.mrf.mxu0
    %265 = vdwg.mxu0
    %v266 = vld [vmem:[%s4] sm:$0xff]
    %v267 = vld [vmem:[%s4 + $0x8] sm:$0xff]
    %v268 = vld [vmem:[%s4 + $0x10] sm:$0xff]
    %v269 = vld [vmem:[%s4 + $0x18] sm:$0xff]
    %v270 = vld [vmem:[%s5] sm:$0xff]
    %v271 = vld [vmem:[%s5 + $0x8] sm:$0xff]
    %v272 = vld [vmem:[%s5 + $0x10] sm:$0xff]
    %v273 = vld [vmem:[%s5 + $0x18] sm:$0xff]
    %275 = vset.pattern.permute.xlu0 0
    %276 = vperm.xlu0 %275, %v270
    %v277 = vpop.permute.xlu0 %276
    %280 = vset.pattern.permute.xlu0 0
    %281 = vperm.xlu0 %280, %v271
    %v282 = vpop.permute.xlu0 %281
    %285 = vset.pattern.permute.xlu0 0
    %286 = vperm.xlu0 %285, %v272
    %v287 = vpop.permute.xlu0 %286
    %290 = vset.pattern.permute.xlu0 0
    %291 = vperm.xlu0 %290, %v273
    %v292 = vpop.permute.xlu0 %291
    %vm294 = vcmask 261120
    %v296 = vsel %vm294, %v266, 0
    %v299 = vsel %vm294, %v267, 0
    %v302 = vsel %vm294, %v268, 0
    %v305 = vsel %vm294, %v269, 0
    %307 = vmatprep.subr.mxu0 0.0
    %308 = vmatpush1.msra.mxu0 0.0
    %309 = vmatprep.subr.mxu0 0.0
    %310 = vmatpush1.msra.mxu0 0.0
    %311 = vmatprep.subr.mxu0 0.0
    %312 = vmatpush1.msra.mxu0 0.0
    %313 = vmatprep.subr.mxu0 0.0
    %314 = vmatpush1.msra.mxu0 0.0
    %315 = vmatprep.subr.mxu0 0.0
    %316 = vmatpush1.msra.mxu0 0.0
    %317 = vmatprep.subr.mxu0 0.0
    %318 = vmatpush1.msra.mxu0 0.0
    %319 = vmatprep.subr.mxu0 0.0
    %320 = vmatpush1.msra.mxu0 0.0
    %321 = vmatprep.subr.mxu0 0.0
    %322 = vmatpush1.msra.mxu0 0.0
    %323 = vmatprep.subr.mxu0 0.0
    %324 = vmatpush1.msra.mxu0 0.0
    %325 = vmatprep.subr.mxu0 0.0
    %326 = vmatpush1.msra.mxu0 0.0
    %327 = vmatprep.subr.mxu0 0.0
    %328 = vmatpush1.msra.mxu0 0.0
    %329 = vmatprep.subr.mxu0 0.0
    %330 = vmatpush1.msra.mxu0 0.0
    %331 = vmatprep.subr.mxu0 0.0
    %332 = vmatpush1.msra.mxu0 %v263
    %333 = vmatprep.subr.mxu0 0.0
    %334 = vmatpush1.msra.mxu0 %v258
    %335 = vmatprep.subr.mxu0 0.0
    %336 = vmatpush1.msra.mxu0 %v164
    %337 = vmatprep.subr.mxu0 0.0
    %338 = vmatpush1.msra.mxu0 %v159
    %339 = vmatprep.subr.mxu0 0.0
    %340 = vmatpush2.msra.mxu0 0.0
    %341 = vmatprep.subr.mxu0 0.0
    %342 = vmatpush2.msra.mxu0 0.0
    %343 = vmatprep.subr.mxu0 0.0
    %344 = vmatpush2.msra.mxu0 0.0
    %345 = vmatprep.subr.mxu0 0.0
    %346 = vmatpush2.msra.mxu0 0.0
    %347 = vmatprep.subr.mxu0 0.0
    %348 = vmatpush2.msra.mxu0 0.0
    %349 = vmatprep.subr.mxu0 0.0
    %350 = vmatpush2.msra.mxu0 0.0
    %351 = vmatprep.subr.mxu0 0.0
    %352 = vmatpush2.msra.mxu0 0.0
    %353 = vmatprep.subr.mxu0 0.0
    %354 = vmatpush2.msra.mxu0 0.0
    %355 = vmatprep.subr.mxu0 0.0
    %356 = vmatpush2.msra.mxu0 0.0
    %357 = vmatprep.subr.mxu0 0.0
    %358 = vmatpush2.msra.mxu0 0.0
    %359 = vmatprep.subr.mxu0 0.0
    %360 = vmatpush2.msra.mxu0 0.0
    %361 = vmatprep.subr.mxu0 0.0
    %362 = vmatpush2.msra.mxu0 0.0
    %363 = vmatprep.subr.mxu0 0.0
    %364 = vmatpush2.msra.mxu0 0.0
    %365 = vmatprep.subr.mxu0 0.0
    %366 = vmatpush2.msra.mxu0 0.0
    %367 = vmatprep.subr.mxu0 0.0
    %368 = vmatpush2.msra.mxu0 0.0
    %369 = vmatprep.subr.mxu0 0.0
    %370 = vmatpush2.msra.mxu0 0.0
    %371 = vmatprep.mubr.f32.mxu0 0.0
    %372 = vmatmul.mubr.f32.gmra.mxu0 %v296
    %v373 = vpop.f32.mrf.mxu0
    %v374 = vadd.f32 %v277, %v373
    %v375 = vpop.f32.mrf.mxu0
    %376 = vmatprep.mubr.f32.mxu0 0.0
    %377 = vmatmul.mubr.f32.gmra.mxu0 %v299
    %v378 = vpop.f32.mrf.mxu0
    %v379 = vadd.f32 %v282, %v378
    %v380 = vpop.f32.mrf.mxu0
    %381 = vmatprep.mubr.f32.mxu0 0.0
    %382 = vmatmul.mubr.f32.gmra.mxu0 %v302
    %v383 = vpop.f32.mrf.mxu0
    %v384 = vadd.f32 %v287, %v383
    %v385 = vpop.f32.mrf.mxu0
    %386 = vmatprep.mubr.f32.mxu0 0.0
    %387 = vmatmul.mubr.f32.gmra.mxu0 %v305
    %v388 = vpop.f32.mrf.mxu0
    %v389 = vadd.f32 %v292, %v388
    %v390 = vpop.f32.mrf.mxu0
    %391 = vdwg.mxu0
    %v392 = vmax.f32 %v374, 0.0
    %v393 = vmax.f32 %v379, 0.0
    %v394 = vmax.f32 %v384, 0.0
    %v395 = vmax.f32 %v389, 0.0
    %v396 = vld [vmem:[#allocation6] sm:$0xff]
    %v397 = vld [vmem:[#allocation6 + $0x8] sm:$0xff]
    %v398 = vld [vmem:[%s7] sm:$0xff]
    %v399 = vld [vmem:[%s7 + $0x8] sm:$0xff]
    %401 = vset.pattern.permute.xlu0 0
    %402 = vperm.xlu0 %401, %v398
    %v403 = vpop.permute.xlu0 %402
    %406 = vset.pattern.permute.xlu0 0
    %407 = vperm.xlu0 %406, %v399
    %v408 = vpop.permute.xlu0 %407
    %v411 = vsel %vm294, %v396, 0
    %v414 = vsel %vm294, %v397, 0
    %416 = vmatprep.subr.mxu0 0.0
    %417 = vmatpush1.msra.mxu0 0.0
    %418 = vmatprep.subr.mxu0 0.0
    %419 = vmatpush1.msra.mxu0 0.0
    %420 = vmatprep.subr.mxu0 0.0
    %421 = vmatpush1.msra.mxu0 0.0
    %422 = vmatprep.subr.mxu0 0.0
    %423 = vmatpush1.msra.mxu0 0.0
    %424 = vmatprep.subr.mxu0 0.0
    %425 = vmatpush1.msra.mxu0 0.0
    %426 = vmatprep.subr.mxu0 0.0
    %427 = vmatpush1.msra.mxu0 0.0
    %428 = vmatprep.subr.mxu0 0.0
    %429 = vmatpush1.msra.mxu0 0.0
    %430 = vmatprep.subr.mxu0 0.0
    %431 = vmatpush1.msra.mxu0 0.0
    %432 = vmatprep.subr.mxu0 0.0
    %433 = vmatpush1.msra.mxu0 0.0
    %434 = vmatprep.subr.mxu0 0.0
    %435 = vmatpush1.msra.mxu0 0.0
    %436 = vmatprep.subr.mxu0 0.0
    %437 = vmatpush1.msra.mxu0 0.0
    %438 = vmatprep.subr.mxu0 0.0
    %439 = vmatpush1.msra.mxu0 0.0
    %440 = vmatprep.subr.mxu0 0.0
    %441 = vmatpush1.msra.mxu0 %v395
    %442 = vmatprep.subr.mxu0 0.0
    %443 = vmatpush1.msra.mxu0 %v394
    %444 = vmatprep.subr.mxu0 0.0
    %445 = vmatpush1.msra.mxu0 %v393
    %446 = vmatprep.subr.mxu0 0.0
    %447 = vmatpush1.msra.mxu0 %v392
    %448 = vmatprep.subr.mxu0 0.0
    %449 = vmatpush2.msra.mxu0 0.0
    %450 = vmatprep.subr.mxu0 0.0
    %451 = vmatpush2.msra.mxu0 0.0
    %452 = vmatprep.subr.mxu0 0.0
    %453 = vmatpush2.msra.mxu0 0.0
    %454 = vmatprep.subr.mxu0 0.0
    %455 = vmatpush2.msra.mxu0 0.0
    %456 = vmatprep.subr.mxu0 0.0
    %457 = vmatpush2.msra.mxu0 0.0
    %458 = vmatprep.subr.mxu0 0.0
    %459 = vmatpush2.msra.mxu0 0.0
    %460 = vmatprep.subr.mxu0 0.0
    %461 = vmatpush2.msra.mxu0 0.0
    %462 = vmatprep.subr.mxu0 0.0
    %463 = vmatpush2.msra.mxu0 0.0
    %464 = vmatprep.subr.mxu0 0.0
    %465 = vmatpush2.msra.mxu0 0.0
    %466 = vmatprep.subr.mxu0 0.0
    %467 = vmatpush2.msra.mxu0 0.0
    %468 = vmatprep.subr.mxu0 0.0
    %469 = vmatpush2.msra.mxu0 0.0
    %470 = vmatprep.subr.mxu0 0.0
    %471 = vmatpush2.msra.mxu0 0.0
    %472 = vmatprep.subr.mxu0 0.0
    %473 = vmatpush2.msra.mxu0 0.0
    %474 = vmatprep.subr.mxu0 0.0
    %475 = vmatpush2.msra.mxu0 0.0
    %476 = vmatprep.subr.mxu0 0.0
    %477 = vmatpush2.msra.mxu0 0.0
    %478 = vmatprep.subr.mxu0 0.0
    %479 = vmatpush2.msra.mxu0 0.0
    %480 = vmatprep.mubr.f32.mxu0 0.0
    %481 = vmatmul.mubr.f32.gmra.mxu0 %v411
    %v482 = vpop.f32.mrf.mxu0
    %v483 = vadd.f32 %v403, %v482
    %v484 = vpop.f32.mrf.mxu0
    %485 = vmatprep.mubr.f32.mxu0 0.0
    %486 = vmatmul.mubr.f32.gmra.mxu0 %v414
    %v487 = vpop.f32.mrf.mxu0
    %v488 = vadd.f32 %v408, %v487
    %v489 = vpop.f32.mrf.mxu0
    %490 = vdwg.mxu0
    %v491 = vmax.f32 %v483, 0.0
    %v492 = vmax.f32 %v488, 0.0
    %v493 = vld [vmem:[%s8] sm:$0x1]
    %s494 = sld [smem:[#allocation2]]
    %v495 = vstv %s494
    %vm496 = vcmask 130048
    %v498 = vsel %vm496, %v493, 0
    %500 = vmatprep.subr.mxu0 0.0
    %501 = vmatpush1.msra.mxu0 0.0
    %502 = vmatprep.subr.mxu0 0.0
    %503 = vmatpush1.msra.mxu0 0.0
    %504 = vmatprep.subr.mxu0 0.0
    %505 = vmatpush1.msra.mxu0 0.0
    %506 = vmatprep.subr.mxu0 0.0
    %507 = vmatpush1.msra.mxu0 0.0
    %508 = vmatprep.subr.mxu0 0.0
    %509 = vmatpush1.msra.mxu0 0.0
    %510 = vmatprep.subr.mxu0 0.0
    %511 = vmatpush1.msra.mxu0 0.0
    %512 = vmatprep.subr.mxu0 0.0
    %513 = vmatpush1.msra.mxu0 0.0
    %514 = vmatprep.subr.mxu0 0.0
    %515 = vmatpush1.msra.mxu0 0.0
    %516 = vmatprep.subr.mxu0 0.0
    %517 = vmatpush1.msra.mxu0 0.0
    %518 = vmatprep.subr.mxu0 0.0
    %519 = vmatpush1.msra.mxu0 0.0
    %520 = vmatprep.subr.mxu0 0.0
    %521 = vmatpush1.msra.mxu0 0.0
    %522 = vmatprep.subr.mxu0 0.0
    %523 = vmatpush1.msra.mxu0 0.0
    %524 = vmatprep.subr.mxu0 0.0
    %525 = vmatpush1.msra.mxu0 0.0
    %526 = vmatprep.subr.mxu0 0.0
    %527 = vmatpush1.msra.mxu0 0.0
    %528 = vmatprep.subr.mxu0 0.0
    %529 = vmatpush1.msra.mxu0 %v492
    %530 = vmatprep.subr.mxu0 0.0
    %531 = vmatpush1.msra.mxu0 %v491
    %532 = vmatprep.subr.mxu0 0.0
    %533 = vmatpush2.msra.mxu0 0.0
    %534 = vmatprep.subr.mxu0 0.0
    %535 = vmatpush2.msra.mxu0 0.0
    %536 = vmatprep.subr.mxu0 0.0
    %537 = vmatpush2.msra.mxu0 0.0
    %538 = vmatprep.subr.mxu0 0.0
    %539 = vmatpush2.msra.mxu0 0.0
    %540 = vmatprep.subr.mxu0 0.0
    %541 = vmatpush2.msra.mxu0 0.0
    %542 = vmatprep.subr.mxu0 0.0
    %543 = vmatpush2.msra.mxu0 0.0
    %544 = vmatprep.subr.mxu0 0.0
    %545 = vmatpush2.msra.mxu0 0.0
    %546 = vmatprep.subr.mxu0 0.0
    %547 = vmatpush2.msra.mxu0 0.0
    %548 = vmatprep.subr.mxu0 0.0
    %549 = vmatpush2.msra.mxu0 0.0
    %550 = vmatprep.subr.mxu0 0.0
    %551 = vmatpush2.msra.mxu0 0.0
    %552 = vmatprep.subr.mxu0 0.0
    %553 = vmatpush2.msra.mxu0 0.0
    %554 = vmatprep.subr.mxu0 0.0
    %555 = vmatpush2.msra.mxu0 0.0
    %556 = vmatprep.subr.mxu0 0.0
    %557 = vmatpush2.msra.mxu0 0.0
    %558 = vmatprep.subr.mxu0 0.0
    %559 = vmatpush2.msra.mxu0 0.0
    %560 = vmatprep.subr.mxu0 0.0
    %561 = vmatpush2.msra.mxu0 0.0
    %562 = vmatprep.subr.mxu0 0.0
    %563 = vmatpush2.msra.mxu0 0.0
    %564 = vmatprep.mubr.f32.mxu0 0.0
    %565 = vmatmul.mubr.f32.gmra.mxu0 %v498
    %v566 = vpop.f32.mrf.mxu0
    %v567 = vadd.f32 %v495, %v566
    %v568 = vpop.f32.mrf.mxu0
    %569 = vdwg.mxu0
    %570 = vst [vmem:[#allocation8] sm:$0x1] %v567
    // Predicated region
    $region50: #{tpu_custom_call.1} parent=1 // pred_check
      _
    $region51: #{tpu_custom_call.1} parent=1 // pred_check_branch
      %572 = sbr.rel (0) target = $region53
    $region52: #{tpu_custom_call.1} parent=1 // pred_region
      %s574 = ssub.s32 16, 16
      %575 = vsyncadd [#allocation5], %s574
      %s577 = sshll.u32 [#allocation8], 4
      %s578 = int_to_ptr.vmem [resolvable:$true] %s577
      %580 = dma.vmem_to_hbm [thread:$0]  %s578, 16, %s10, [#allocation5]
    $region53: #{tpu_custom_call.1} parent=1 // pred_fallthru
      _
    // Predicated region
    $region54: #{tpu_custom_call.1} parent=1 // pred_check
      _
    $region55: #{tpu_custom_call.1} parent=1 // pred_check_branch
      %582 = sbr.rel (0) target = $region57
    $region56: #{tpu_custom_call.1} parent=1 // pred_region
      %583 = dma.done [#allocation5], 16
    $region57: #{tpu_custom_call.1} parent=1 // pred_fallthru
      _
    %584 = vsyncpa [#allocation4], 1
    %585 = vsyncpa [#allocation7], 1
    %586 = vsyncpa [#allocation5], 1

</llo_original>
